<compile_context>
chip_gen: v5e
topology: v5e:2x2
jax: 0.10.0
libtpu: 0.0.40
codegen_flags: <defaults>
</compile_context>

<pallas_src>
import jax
import jax.numpy as jnp
from jax.experimental import pallas as pl
from jax.experimental.pallas import tpu as pltpu


def _round_up(x, m):
    return ((x + m - 1) // m) * m


def _row_tile(dtype):
    # Minimum sublane tile for the second-to-last dim, by packed dtype width.
    itemsize = jnp.dtype(dtype).itemsize
    return {4: 8, 2: 16, 1: 32}.get(itemsize, 8)


def _device_kind():
    try:
        return jax.devices()[0].device_kind.lower()
    except Exception:  # pragma: no cover - defensive (e.g. no devices yet)
        return ""


def _make_kernel(exact_div):
    def kernel(x_ref, scale_ref, o_ref):
        s = scale_ref[...]                      # (blk_r, 1) f32 per-row scale
        x = x_ref[...].astype(jnp.float32)      # native-dtype load, f32 math
        if exact_div:
            # Bit-compatible with torch's `tensor / self.scale`.
            q = jnp.round(x / s)
        else:
            # Hoisted divide: one reciprocal per row instead of per element.
            # <=1 ULP vs x/s; only matters at exact .5 rounding ties.
            q = jnp.round(x * (1.0 / s))
        o_ref[...] = (s * q).astype(o_ref.dtype)

    return kernel


def quantizer_forward(x_nchw, scale_c, zero_point_c, *,
                      lane_blk=2048, exact_div=None, force_kernel=False):
    """Fake-quantize an NCHW tensor with per-channel scale.

    x_nchw:       (N, C, H, W) float32 or bfloat16
    scale_c:      (C,)         per-channel scale
    zero_point_c: (C,)         per-channel zero point (cancels exactly in the
                               forward value; kept for API parity)
    returns       (N, C, H, W) in x_nchw.dtype
    """
    del zero_point_c  # integer-valued zp cancels exactly in the forward value

    N, C, H, W = x_nchw.shape
    R, L = N * C, H * W
    dtype = x_nchw.dtype
    itemsize = jnp.dtype(dtype).itemsize

    kind = _device_kind()
    is_v7 = "v7" in kind
    big_vmem = is_v7 or ("v6" in kind)
    if exact_div is None:
        # Reciprocal-multiply only where VALU pressure can matter (v7x);
        # elsewhere keep the torch-exact divide (free filler under HBM roofline).
        exact_div = not is_v7

    scale_f32 = scale_c.astype(jnp.float32)

    # Small-input fast path: pallas_call launch overhead dominates below a few
    # hundred KiB; a fused XLA elementwise op is faster and simpler.
    if not force_kernel and R * L * itemsize < (256 << 10):
        s = scale_f32.reshape(1, C, 1, 1)
        return (s * jnp.round(x_nchw.astype(jnp.float32) / s)).astype(dtype)

    # --- kernel path ------------------------------------------------------
    # Free, contiguous reshape: NCHW -> (N*C, H*W).  No HBM transposes/pads.
    x2d = x_nchw.reshape(R, L)

    row_tile = _row_tile(dtype)

    # Per-buffer byte target: 4 MiB on v6e/v7x (in+out double-buffered fits the
    # 32 MiB scoped-VMEM default with headroom), 2 MiB elsewhere (v5e: 16 MiB).
    target_bytes = (4 << 20) if big_vmem else (2 << 20)

    blk_l = min(lane_blk, _round_up(L, 128))
    blk_r = max(row_tile,
                (target_bytes // (blk_l * itemsize)) // row_tile * row_tile)
    blk_r = min(blk_r, _round_up(R, row_tile))

    grid_r = pl.cdiv(R, blk_r)
    grid_l = pl.cdiv(L, blk_l)

    # Megacore (v7x has 2 TCs): ensure at least one parallel axis has >= 2 steps.
    if grid_r == 1 and grid_l == 1:
        if R >= 2 * row_tile:
            blk_r = _round_up(pl.cdiv(R, 2), row_tile)
            grid_r = pl.cdiv(R, blk_r)
        elif L >= 2 * 128:
            blk_l = _round_up(pl.cdiv(L, 2), 128)
            grid_l = pl.cdiv(L, blk_l)

    # Per-row scale: row r = n*C + c  ->  channel c = r % C.  Tiny array; pad
    # it (with 1.0) to a whole number of row blocks so ragged boundary blocks
    # never divide by garbage.  The big activation array is NOT padded: Pallas
    # masks the ragged boundary blocks, avoiding pad/slice HBM round-trips.
    r_pad = grid_r * blk_r
    scale_rows = jnp.broadcast_to(scale_f32.reshape(1, C), (N, C)).reshape(R, 1)
    if r_pad > R:
        scale_rows = jnp.pad(scale_rows, ((0, r_pad - R), (0, 0)),
                             constant_values=1.0)

    out2d = pl.pallas_call(
        _make_kernel(exact_div),
        out_shape=jax.ShapeDtypeStruct((R, L), dtype),
        grid_spec=pltpu.PrefetchScalarGridSpec(
            num_scalar_prefetch=0,
            # Lanes innermost: the (blk_r, 1) scale block index is constant
            # across the inner loop, so it is fetched once per row block.
            grid=(grid_r, grid_l),
            in_specs=[
                pl.BlockSpec((blk_r, blk_l), lambda i, j: (i, j)),  # activations
                pl.BlockSpec((blk_r, 1), lambda i, j: (i, 0)),       # per-row scale
            ],
            out_specs=pl.BlockSpec((blk_r, blk_l), lambda i, j: (i, j)),
        ),
        compiler_params=pltpu.CompilerParams(
            dimension_semantics=("parallel", "parallel"),
        ),
    )(x2d, scale_rows)

    return out2d.reshape(N, C, H, W)


def _reference(x_nchw, scale_c, zero_point_c):
    # Forward value of the PyTorch module (full STE expression; collapses to
    # s * round(x / s)).  No clamp, matching the original forward.
    s = scale_c.astype(jnp.float32).reshape(1, -1, 1, 1)
    zp = zero_point_c.astype(jnp.float32).reshape(1, -1, 1, 1)
    xf = x_nchw.astype(jnp.float32)
    quant = (jnp.round(xf / s) - xf / s) + xf / s + zp
    return (s * (quant - zp)).astype(x_nchw.dtype)


if __name__ == "__main__":
    key = jax.random.PRNGKey(0)
    N, C, H, W = 2, 4, 16, 16
    bit = 8  # only affects qparam calibration (observer path), not modeled here

    k1, k2 = jax.random.split(key)
    x = jax.random.normal(k1, (N, C, H, W), dtype=jnp.float32)

    # Deterministic synthetic per-channel qparams (what update_qparams would
    # set).  Power-of-two scales make x/s and x*(1/s) bit-identical, so the
    # checks are insensitive to the v7x reciprocal-multiply micro-opt.
    scale = 2.0 ** -(4.0 + (jnp.arange(C, dtype=jnp.float32) % 3.0))
    zero_point = jnp.arange(C, dtype=jnp.float32) - (C // 2)

    # 1) Spec-shaped input through the Pallas kernel path.
    out = jax.block_until_ready(
        quantizer_forward(x, scale, zero_point, force_kernel=True))
    assert out.shape == (N, C, H, W)
    assert jnp.allclose(out, _reference(x, scale, zero_point),
                        atol=1e-6, rtol=1e-6), "kernel mismatch vs reference"

    # 2) Default dispatch (small-input fast path) must agree with the kernel.
    out_fast = jax.block_until_ready(quantizer_forward(x, scale, zero_point))
    assert jnp.allclose(out_fast, out, atol=1e-6, rtol=1e-6), "fast-path mismatch"

    # 3) Ragged lane extent (H*W = 196, not a multiple of 128): exercises the
    #    masked boundary blocks (no pad/slice HBM round-trips).
    C2 = 8
    x2 = jax.random.normal(k2, (2, C2, 14, 14), dtype=jnp.float32)
    scale2 = 2.0 ** -(3.0 + (jnp.arange(C2, dtype=jnp.float32) % 4.0))
    zp2 = jnp.zeros((C2,), jnp.float32)
    out2 = jax.block_until_ready(
        quantizer_forward(x2, scale2, zp2, force_kernel=True))
    assert jnp.allclose(out2, _reference(x2, scale2, zp2),
                        atol=1e-6, rtol=1e-6), "ragged-shape mismatch"

    # 4) Native bf16 I/O: kernel loads/stores bf16, computes in f32 internally.
    x3 = x.astype(jnp.bfloat16)
    out3 = jax.block_until_ready(
        quantizer_forward(x3, scale, zero_point, force_kernel=True))
    ref3 = _reference(x3, scale, zero_point)
    assert out3.dtype == jnp.bfloat16
    assert jnp.allclose(out3.astype(jnp.float32), ref3.astype(jnp.float32),
                        atol=1e-2, rtol=1e-2), "bf16 mismatch"

    print("KERNEL_OK")
</pallas_src>

<mosaic_0001>
module attributes {stable_mosaic.version = 11 : i64} {
  func.func @kernel(%arg0: i32, %arg1: i32, %arg2: memref<8x128xf32, #tpu.memory_space<vmem>>, %arg3: memref<8x1xf32, #tpu.memory_space<vmem>>, %arg4: memref<8x128xf32, #tpu.memory_space<vmem>>) attributes {dimension_semantics = [#tpu.dimension_semantics<parallel>, #tpu.dimension_semantics<parallel>], iteration_bounds = array<i64: 1, 2>, scalar_prefetch = 0 : i64, scratch_operands = 0 : i64, tpu.core_type = #tpu.core_type<tc>, window_params = [{transform_indices = @transform_0, window_bounds = array<i64: 8, 128>}, {transform_indices = @transform_1, window_bounds = array<i64: 8, 1>}, {transform_indices = @transform_2, window_bounds = array<i64: 8, 128>}]} {
    %c0 = arith.constant 0 : index
    %c0_0 = arith.constant 0 : index
    %0 = vector.load %arg3[%c0, %c0_0] : memref<8x1xf32, #tpu.memory_space<vmem>>, vector<8x1xf32>
    %c0_1 = arith.constant 0 : index
    %c0_2 = arith.constant 0 : index
    %1 = vector.load %arg2[%c0_1, %c0_2] : memref<8x128xf32, #tpu.memory_space<vmem>>, vector<8x128xf32>
    %2 = vector.broadcast %0 : vector<8x1xf32> to vector<8x128xf32>
    %3 = arith.divf %1, %2 : vector<8x128xf32>
    %4 = math.roundeven %3 : vector<8x128xf32>
    %5 = vector.broadcast %0 : vector<8x1xf32> to vector<8x128xf32>
    %6 = arith.mulf %5, %4 : vector<8x128xf32>
    %c0_3 = arith.constant 0 : index
    %c0_4 = arith.constant 0 : index
    %7 = vector.load %arg4[%c0_3, %c0_4] : memref<8x128xf32, #tpu.memory_space<vmem>>, vector<8x128xf32>
    tpu.vector_store %arg4[%c0_3, %c0_4], %6 {strides = array<i32>} : memref<8x128xf32, #tpu.memory_space<vmem>>, vector<8x128xf32>,
    return
  }
  func.func @transform_0(%arg0: i32, %arg1: i32) -> (i32, i32) {
    %c0_i32 = arith.constant 0 : i32
    return %arg0, %arg1 : i32, i32
  }
  func.func @transform_1(%arg0: i32, %arg1: i32) -> (i32, i32) {
    %c0_i32 = arith.constant 0 : i32
    %c0_i32_0 = arith.constant 0 : i32
    return %arg0, %c0_i32 : i32, i32
  }
  func.func @transform_2(%arg0: i32, %arg1: i32) -> (i32, i32) {
    %c0_i32 = arith.constant 0 : i32
    return %arg0, %arg1 : i32, i32
  }
}

</mosaic_0001>

<llo_original>
// kernel: tpu_custom_call.1
$region0: #{tpu_custom_call.1}
  #allocation0 [shape = 'u32[]', space=smem, size = 0x4, offset = 0x4, fixed_abs, tag = 'smem constant byte address 0x4 - core index']
  #allocation1 [shape = 'u32[72,128]{1,0:T(1,128)}', space=vmem, size = 0x9000, scoped, tag = 'internal scratch']
  %s0 = inlined_call_operand.hbm [shape: f32[8,256], index: 0, kind: input, shape index: {}]
  %s1 = inlined_call_operand.vmem [shape: f32[8,1], index: 1, kind: input, shape index: {}]
  %s2 = inlined_call_operand.hbm [shape: f32[8,256], index: 2, kind: output, shape index: {}]
  %s3 = sld [smem:[#allocation0]]
  $region45: #{tpu_custom_call.1} parent=0
    _
  %s5 = ssub.s32 1, %s3
  %s6 = scalar_select 0, %s5, %s3
  $region1: #{tpu_custom_call.1} parent=0
    #allocation2 [shape = 'u8[8192]{0}', space=vmem, size = 0x2000, scoped, tag = 'input window, operand 0']
    #allocation3 [shape = 's32[2]{0}', space=sflag, size = 0x8, scoped, tag = 'scoped memory for tpu_custom_call.1']
    #allocation4 [shape = 's32[2]{0}', space=sflag, size = 0x8, scoped, tag = 'scoped memory for tpu_custom_call.1']
    #allocation5 [shape = 'u8[8192]{0}', space=vmem, size = 0x2000, scoped, tag = 'output window, operand 0']
    %7 = vsyncpa [#allocation3], 0
    %s8 = scalar_lea.sflag [#allocation3], 1
    %9 = vsyncpa %s8, 0
    %10 = vsyncpa [#allocation4], 0
    %s11 = scalar_lea.sflag [#allocation4], 1
    %12 = vsyncpa %s11, 0
    loop: start=0, step=1, limit=4
    $region2: #{tpu_custom_call.1} parent=1 // loop_pre_header
      _
    $region3: #{tpu_custom_call.1} parent=1 // loop_header
      %s14 = sphi 0, %s18
      %p15 = scmp.ge.s32.totalorder %s14, 4
      %s21 = sphi 0, %s33
      %s22 = sphi 0, %s29
      %s23 = sphi 0, %s21
      %s24 = sphi 0, %s22
      %s25 = sphi 0, %s23
      %s26 = sphi 0, %s24
      %s38 = sphi 0, %s40
      %s41 = sphi 0, %s38
      %s42 = sphi 0, %s41
      %s58 = sphi 0, %s42
      %s64 = sphi 0, %s66
      %s67 = sphi 0, %s64
      %s68 = sphi 0, %s67
      %s84 = sphi 0, %s68
      %s92 = sphi 0, %s94
      %s95 = sphi 0, %s92
      %s96 = sphi 0, %s95
      %s112 = sphi 0, %s96
    $region4: #{tpu_custom_call.1} parent=1 // loop_header_branch
      %17 = sbr.rel (%p15) target = $region8
    $region5: #{tpu_custom_call.1} parent=1 // loop_body
      %s19 = ssub.s32 %s14, 1
      %s20 = ssub.s32 %s14, 2
      %s27 = sadd.s32 1, %s22
      %p28 = scmp.ge.s32.totalorder %s27, 2
      %s29 = scalar_select %p28, 0, %s27
      %s30 = sadd.s32 1, %s21
      %s31 = scalar_select %p28, %s30, %s21
      %p32 = scmp.ge.s32.totalorder %s31, 1
      %s33 = scalar_select %p32, 0, %s31
      %s34 = ssub.s32 %s21, %s33
      %s35 = ssub.s32 %s22, %s29
      %s36 = sor.u32 %s34, %s35
      %p37 = scmp.eq.s32.totalorder %s36, 0
      %s39 = sadd.s32 %s38, 1
      %s40 = scalar_select %p37, %s38, %s39
      %p43 = pneg %p37
      %p44 = scmp.eq.s32.totalorder %s14, 1
      %p45 = por %p43, %p44
      %p46 = scmp.ne.s32.totalorder %s38, %s41
      %p47 = scmp.eq.s32.totalorder %s14, 0
      %p48 = por %p46, %p47
      %p49 = scmp.ne.s32.totalorder %s38, %s41
      %p50 = scmp.eq.s32.totalorder %s19, 1
      %p51 = por %p49, %p50
      %p52 = scmp.ne.s32.totalorder %s41, %s42
      %p53 = scmp.eq.s32.totalorder %s19, 0
      %p54 = por %p52, %p53
      %p55 = scmp.ne.s32.totalorder %s41, %s42
      %p56 = scmp.eq.s32.totalorder %s20, 1
      %p57 = por %p55, %p56
      %p59 = scmp.ne.s32.totalorder %s42, %s58
      %p60 = scmp.eq.s32.totalorder %s20, 0
      %p61 = por %p59, %p60
      %s62 = ssub.s32 %s21, %s33
      %p63 = scmp.eq.s32.totalorder %s62, 0
      %s65 = sadd.s32 %s64, 1
      %s66 = scalar_select %p63, %s64, %s65
      %p69 = pneg %p63
      %p70 = scmp.eq.s32.totalorder %s14, 1
      %p71 = por %p69, %p70
      %p72 = scmp.ne.s32.totalorder %s64, %s67
      %p73 = scmp.eq.s32.totalorder %s14, 0
      %p74 = por %p72, %p73
      %p75 = scmp.ne.s32.totalorder %s64, %s67
      %p76 = scmp.eq.s32.totalorder %s19, 1
      %p77 = por %p75, %p76
      %p78 = scmp.ne.s32.totalorder %s67, %s68
      %p79 = scmp.eq.s32.totalorder %s19, 0
      %p80 = por %p78, %p79
      %p81 = scmp.ne.s32.totalorder %s67, %s68
      %p82 = scmp.eq.s32.totalorder %s20, 1
      %p83 = por %p81, %p82
      %p85 = scmp.ne.s32.totalorder %s68, %s84
      %p86 = scmp.eq.s32.totalorder %s20, 0
      %p87 = por %p85, %p86
      %s88 = ssub.s32 %s21, %s33
      %s89 = ssub.s32 %s22, %s29
      %s90 = sor.u32 %s88, %s89
      %p91 = scmp.eq.s32.totalorder %s90, 0
      %s93 = sadd.s32 %s92, 1
      %s94 = scalar_select %p91, %s92, %s93
      %p97 = pneg %p91
      %p98 = scmp.eq.s32.totalorder %s14, 1
      %p99 = por %p97, %p98
      %p100 = scmp.ne.s32.totalorder %s92, %s95
      %p101 = scmp.eq.s32.totalorder %s14, 0
      %p102 = por %p100, %p101
      %p103 = scmp.ne.s32.totalorder %s92, %s95
      %p104 = scmp.eq.s32.totalorder %s19, 1
      %p105 = por %p103, %p104
      %p106 = scmp.ne.s32.totalorder %s95, %s96
      %p107 = scmp.eq.s32.totalorder %s19, 0
      %p108 = por %p106, %p107
      %p109 = scmp.ne.s32.totalorder %s95, %s96
      %p110 = scmp.eq.s32.totalorder %s20, 1
      %p111 = por %p109, %p110
      %p113 = scmp.ne.s32.totalorder %s96, %s112
      %p114 = scmp.eq.s32.totalorder %s20, 0
      %p115 = por %p113, %p114
      %p116 = scmp.le.s32.totalorder 1, %s14
      %p117 = scmp.lt.s32.totalorder %s14, 3
      %p118 = pnand %p116, %p117
      %p119 = pneg %p118
      // Predicated region
      $region9: #{tpu_custom_call.1} parent=5 // pred_check
        _
      $region10: #{tpu_custom_call.1} parent=5 // pred_check_branch
        %121 = sbr.rel (%p118) target = $region12
      $region11: #{tpu_custom_call.1} parent=5 // pred_region
        %s122 = ssub.s32 %s14, 1
        // Predicated region
        $region13: #{tpu_custom_call.1} parent=11 // pred_check
          %p123 = pneg %p80
        $region14: #{tpu_custom_call.1} parent=11 // pred_check_branch
          %125 = sbr.rel (%p123) target = $region16
        $region15: #{tpu_custom_call.1} parent=11 // pred_region
          %p126 = scmp.lt.s32.totalorder %s23, 0
          %s127 = scalar_select %p126, %s23, 0
          %s128 = smul.addr %s127, 8
          %s129 = scalar_lea.vmem %s1, %s128
        $region16: #{tpu_custom_call.1} parent=11 // pred_fallthru
          _
      $region12: #{tpu_custom_call.1} parent=5 // pred_fallthru
        _
      %p130 = scmp.lt.s32.totalorder %s14, 2
      // Predicated region
      $region17: #{tpu_custom_call.1} parent=5 // pred_check
        %p131 = pneg %p130
      $region18: #{tpu_custom_call.1} parent=5 // pred_check_branch
        %133 = sbr.rel (%p131) target = $region20
      $region19: #{tpu_custom_call.1} parent=5 // pred_region
        // Predicated region
        $region21: #{tpu_custom_call.1} parent=19 // pred_check
          %p134 = pneg %p48
        $region22: #{tpu_custom_call.1} parent=19 // pred_check_branch
          %136 = sbr.rel (%p134) target = $region24
        $region23: #{tpu_custom_call.1} parent=19 // pred_region
          %s137 = sand.u32 %s38, 1
          %s138 = scalar_lea.sflag [#allocation3], %s137
          %s139 = sand.u32 %s38, 1
          %s140 = smul.addr %s139, 8
          %s141 = scalar_lea.vmem [#allocation2], %s140
          %143 = vsyncadd %s138, 0
          %s144 = smul.addr %s21, 2
          %s145 = sadd.s32 %s22, %s144
          %s146 = smul.addr %s145, 8
          %s147 = scalar_lea.hbm %s0, %s146
          %s149 = sshll.u32 %s147, 4
          %s150 = int_to_ptr.hbm [resolvable:$true] %s149
          %s151 = sshll.u32 %s141, 4
          %s152 = int_to_ptr.vmem [resolvable:$true] %s151
          %154 = dma.hbm_to_vmem [thread:$0]  %s150, 128, %s152, %s138
        $region24: #{tpu_custom_call.1} parent=19 // pred_fallthru
          _
      $region20: #{tpu_custom_call.1} parent=5 // pred_fallthru
        _
      %p155 = scmp.le.s32.totalorder 1, %s14
      %p156 = scmp.lt.s32.totalorder %s14, 3
      %p157 = pnand %p155, %p156
      %p158 = pneg %p157
      // Predicated region
      $region25: #{tpu_custom_call.1} parent=5 // pred_check
        _
      $region26: #{tpu_custom_call.1} parent=5 // pred_check_branch
        %160 = sbr.rel (%p157) target = $region28
      $region27: #{tpu_custom_call.1} parent=5 // pred_region
        %s161 = ssub.s32 %s14, 1
        %s162 = sand.u32 %s41, 1
        %s163 = scalar_lea.sflag [#allocation3], %s162
        %s164 = sand.u32 %s41, 1
        %s165 = smul.addr %s164, 8
        %s166 = scalar_lea.vmem [#allocation2], %s165
        // Predicated region
        $region29: #{tpu_custom_call.1} parent=27 // pred_check
          %p167 = pneg %p54
        $region30: #{tpu_custom_call.1} parent=27 // pred_check_branch
          %169 = sbr.rel (%p167) target = $region32
        $region31: #{tpu_custom_call.1} parent=27 // pred_region
          %171 = dma.done %s163, 128
        $region32: #{tpu_custom_call.1} parent=27 // pred_fallthru
          _
        %s172 = sand.u32 %s41, 1
        %s173 = scalar_lea.sflag [#allocation3], %s172
        %s174 = sand.u32 %s41, 1
        %s175 = smul.addr %s174, 8
        %s176 = scalar_lea.vmem [#allocation2], %s175
        %p177 = pneg %p54
        %p178 = pneg %p51
        %p179 = scmp.lt.s32.totalorder %s23, 0
        %s180 = scalar_select %p179, %s23, 0
        %s181 = smul.addr %s180, 8
        %s182 = scalar_lea.vmem %s1, %s181
        %p183 = pneg %p80
        %p184 = pneg %p77
        %p185 = pneg %p108
        %p186 = pneg %p105
        %s187 = sand.u32 %s95, 1
        %s188 = scalar_lea.sflag [#allocation4], %s187
        %s189 = sand.u32 %s95, 1
        %s190 = smul.addr %s189, 8
        %s191 = scalar_lea.vmem [#allocation5], %s190
        %p192 = scmp.lt.s32.totalorder %s23, 0
        %s193 = scalar_select %p192, %s23, 0
        %s194 = smul.addr %s193, 8
        %s195 = scalar_lea.vmem %s1, %s194
        %v196 = vld [vmem:[%s195] sm:$0xff]
        %v197 = vld [vmem:[%s166] sm:$0xff]
        %199 = vset.pattern.permute.xlu0 0
        %200 = vperm.xlu0 %199, %v196
        %v201 = vpop.permute.xlu0 %200
        %v203 = vrcp.pop %v201
        %v204 = vmul.f32 %v201, %v203
        %v205 = vsub.f32 1.0, %v204
        %v206 = vmul.f32 %v203, %v205
        %v207 = vadd.f32 %v203, %v206
        %vm208 = vweird.f32 %v201
        %vm209 = vweird.f32 %v203
        %vm210 = vmor %vm208, %vm209
        %v211 = vsel %vm210, %v203, %v207
        %v212 = vand.u32 2147483647, %v201
        %vm213 = vcmp.eq.f32.partialorder %v212, 8.507059e+37
        %v214 = vand.u32 %v201, 2147483648
        %v215 = vor.u32 1.1754944e-38, %v214
        %v216 = vsel %vm213, %v215, %v211
        %v217 = vmul.f32 %v197, %v216
        %v218 = vround.ne.pseudo %v217
        %v219 = vmul.f32 %v201, %v218
        %220 = vst [vmem:[%s191] sm:$0xff] %v219
        %s221 = sand.u32 %s95, 1
        %s222 = scalar_lea.sflag [#allocation4], %s221
        %s223 = sand.u32 %s95, 1
        %s224 = smul.addr %s223, 8
        %s225 = scalar_lea.vmem [#allocation5], %s224
        // Predicated region
        $region33: #{tpu_custom_call.1} parent=27 // pred_check
          %p226 = pneg %p105
        $region34: #{tpu_custom_call.1} parent=27 // pred_check_branch
          %228 = sbr.rel (%p226) target = $region36
        $region35: #{tpu_custom_call.1} parent=27 // pred_region
          %230 = vsyncadd %s222, 0
          %s231 = smul.addr %s23, 2
          %s232 = sadd.s32 %s24, %s231
          %s233 = smul.addr %s232, 8
          %s234 = scalar_lea.hbm %s2, %s233
          %s236 = sshll.u32 %s225, 4
          %s237 = int_to_ptr.vmem [resolvable:$true] %s236
          %s238 = sshll.u32 %s234, 4
          %s239 = int_to_ptr.hbm [resolvable:$true] %s238
          %241 = dma.vmem_to_hbm [thread:$0]  %s237, 128, %s239, %s222
        $region36: #{tpu_custom_call.1} parent=27 // pred_fallthru
          _
      $region28: #{tpu_custom_call.1} parent=5 // pred_fallthru
        _
      %p242 = scmp.le.s32.totalorder 2, %s14
      // Predicated region
      $region37: #{tpu_custom_call.1} parent=5 // pred_check
        %p243 = pneg %p242
      $region38: #{tpu_custom_call.1} parent=5 // pred_check_branch
        %245 = sbr.rel (%p243) target = $region40
      $region39: #{tpu_custom_call.1} parent=5 // pred_region
        %s246 = ssub.s32 %s14, 2
        // Predicated region
        $region41: #{tpu_custom_call.1} parent=39 // pred_check
          %p247 = pneg %p111
        $region42: #{tpu_custom_call.1} parent=39 // pred_check_branch
          %249 = sbr.rel (%p247) target = $region44
        $region43: #{tpu_custom_call.1} parent=39 // pred_region
          %s250 = sand.u32 %s96, 1
          %s251 = scalar_lea.sflag [#allocation4], %s250
          %s252 = sand.u32 %s96, 1
          %s253 = smul.addr %s252, 8
          %s254 = scalar_lea.vmem [#allocation5], %s253
          %256 = dma.done %s251, 128
        $region44: #{tpu_custom_call.1} parent=39 // pred_fallthru
          _
      $region40: #{tpu_custom_call.1} parent=5 // pred_fallthru
        _
    $region6: #{tpu_custom_call.1} parent=1 // loop_footer
      %s18 = sadd.s32 1, %s14
    $region7: #{tpu_custom_call.1} parent=1 // loop_footer_branch
      %13 = sbr.rel target = $region3
    $region8: #{tpu_custom_call.1} parent=1 // loop_exit
      _
    %257 = vsyncpa [#allocation3], 1
    %s258 = scalar_lea.sflag [#allocation3], 1
    %259 = vsyncpa %s258, 1
    %260 = vsyncpa [#allocation4], 1
    %s261 = scalar_lea.sflag [#allocation4], 1
    %262 = vsyncpa %s261, 1

</llo_original>
